<compile_context>
chip_gen: v6e
topology: v6e:2x2x1
jax: 0.10.0
libtpu: 0.0.40
codegen_flags: <defaults>
</compile_context>

<pallas_src>
import functools

import jax
import jax.numpy as jnp
import numpy as np
from jax.experimental import pallas as pl
from jax.experimental.pallas import tpu as pltpu


# ----------------------------------------------------------------------------
# Kernel A ('avg'): attention + encoder + value-head layer-1 pre-folded into a
# single (Dp, R*H) bf16 matrix.  One MXU matmul -> ReLU -> per-channel reduce.
# ----------------------------------------------------------------------------
def _avg_folded_kernel(b2_ref,                          # SMEM: (R,) f32
                       x_ref, wf_ref, bf_ref, w2_ref,   # VMEM: (B,Dp) bf16, (Dp,R*H) bf16,
                       out_ref,                         #       (1,R*H) f32, (1,R*H) f32 ; out (B,R)
                       *, hidden, reward_channels):
    # Single bf16 MXU matmul, f32 accumulation.
    h = jnp.dot(x_ref[...], wf_ref[...],
                preferred_element_type=jnp.float32) + bf_ref[...]            # (B, R*H) f32
    hw = jnp.maximum(h, 0.0) * w2_ref[...]                                   # f32 VPU
    for r in range(reward_channels):
        seg = hw[:, r * hidden:(r + 1) * hidden]                             # lane-aligned (H=512)
        out_ref[:, r:r + 1] = jnp.sum(seg, axis=-1, keepdims=True) + b2_ref[r]


# ----------------------------------------------------------------------------
# Kernel B ('max'): block-diagonal encoder matmul (bf16 weights), SMEM-scalar
# attention scaling + max aggregation in f32, per-channel bf16 value-head
# matmul, f32 ReLU + w2 lane reduce, per-channel store.
# ----------------------------------------------------------------------------
def _max_kernel(attn_ref, b2_ref,                       # SMEM: (R,T), (R,)  f32
                x_ref, wbd_ref, bcat_ref,               # VMEM: (B,Dp) bf16, (Dp,T*E) bf16, (1,T*E) f32
                w1_ref, b1_ref, w2_ref,                 # VMEM: (R,E,H) bf16, (R,1,H) f32, (R,1,H) f32
                out_ref,                                # VMEM: (B,R) f32
                *, num_tokens, embed, reward_channels):
    # 1) Ensemble encoder: one (B,Dp) x (Dp,T*E) bf16 MXU matmul, f32 accumulation.
    x_all = jnp.dot(x_ref[...], wbd_ref[...],
                    preferred_element_type=jnp.float32) + bcat_ref[...]      # (B, T*E) f32
    # Per-token embeddings as lane-aligned static slices (E = 256 is a multiple of 128).
    toks = [x_all[:, t * embed:(t + 1) * embed] for t in range(num_tokens)]  # T x (B, E)

    # 2)+3) per reward channel: attention-scaled max -> 2-layer value head.
    for r in range(reward_channels):
        feat = attn_ref[r, 0] * toks[0]                                      # f32 VPU
        for t in range(1, num_tokens):
            feat = jnp.maximum(feat, attn_ref[r, t] * toks[t])               # f32 VPU
        h = jnp.dot(feat.astype(jnp.bfloat16), w1_ref[r],
                    preferred_element_type=jnp.float32) + b1_ref[r]          # (B, H) f32
        h = jnp.maximum(h, 0.0)
        # Second layer has out_features == 1: VPU multiply + lane reduce, not an N=1 matmul.
        v = jnp.sum(h * w2_ref[r], axis=-1, keepdims=True) + b2_ref[r]       # (B, 1)
        out_ref[:, r:r + 1] = v                                              # per-channel store


# ----------------------------------------------------------------------------
# One-time (trace-level) parameter preprocessing.
# ----------------------------------------------------------------------------
def prepare_params(raw, partition, d_pad=128):
    partition = [int(k) for k in partition]
    T = len(partition)
    E = raw["enc_w"].shape[1]
    R, H = raw["vh_w1"].shape[0], raw["vh_w1"].shape[1]
    assert sum(partition) <= d_pad

    offsets, acc = [], 0
    for k in partition:
        offsets.append(acc)
        acc += k

    # Block-diagonal, lane-dense encoder weights (f32 master copy), shape (Dp, T, E).
    # torch Linear weight layout is [out=E, in=max_dim]; columns >= k_t only multiply the zero
    # padding of the inputs, so slicing to [:, :k_t] is exactly equivalent.
    w_bd = jnp.zeros((d_pad, T, E), jnp.float32)
    for t, k in enumerate(partition):
        blk = jnp.transpose(raw["enc_w"][t, :, :k])                          # (k, E)
        w_bd = w_bd.at[offsets[t]:offsets[t] + k, t, :].set(blk)

    attn = jax.nn.softmax(raw["attn_logit"], axis=-1)                        # (R, T), input-independent
    w1 = jnp.transpose(raw["vh_w1"], (0, 2, 1))                              # (R, E, H), H lane-dense

    # --- 'avg' path folding: W_fold[:, r*H:(r+1)*H] = (sum_t attn[r,t] * W_bd_t) @ w1[r] ---
    w_enc_r = jnp.einsum("rt,dte->rde", attn, w_bd, precision="highest")     # (R, Dp, E)
    w_fold = jnp.einsum("rde,reh->drh", w_enc_r, w1,
                        precision="highest").reshape(d_pad, R * H)           # (Dp, R*H)
    b_enc_r = jnp.einsum("rt,te->re", attn, raw["enc_b"], precision="highest")
    b_fold = (jnp.einsum("re,reh->rh", b_enc_r, w1, precision="highest")
              + raw["vh_b1"]).reshape(1, R * H)                              # (1, R*H)

    return {
        # shared
        "b2": raw["vh_b2"].astype(jnp.float32),                              # (R,)
        # 'avg' folded path
        "w_fold": w_fold.astype(jnp.bfloat16),                               # (Dp, R*H) bf16
        "b_fold": b_fold.astype(jnp.float32),                                # (1, R*H)
        "w2_flat": raw["vh_w2"].reshape(1, R * H).astype(jnp.float32),       # (1, R*H)
        # 'max' path
        "attn": attn.astype(jnp.float32),                                    # (R, T)
        "w_bd": w_bd.reshape(d_pad, T * E).astype(jnp.bfloat16),             # (Dp, T*E) bf16
        "b_cat": raw["enc_b"].reshape(1, T * E).astype(jnp.float32),         # (1, T*E)
        "w1": w1.astype(jnp.bfloat16),                                       # (R, E, H) bf16
        "b1": raw["vh_b1"].reshape(R, 1, H).astype(jnp.float32),             # (R, 1, H)
        "w2": raw["vh_w2"].reshape(R, 1, H).astype(jnp.float32),             # (R, 1, H)
        # meta
        "partition": tuple(partition),
        "d_pad": int(d_pad),
        "embed": int(E),
        "hidden": int(H),
        "reward_channels": int(R),
    }


def simple_attn_critic_forward(prep, obs_parts, skill_parts, action_parts, agg):
    # token order matches the torch module: skill + obs + action
    parts = list(skill_parts) + list(obs_parts) + list(action_parts)
    x_cat = jnp.concatenate([p.astype(jnp.float32) for p in parts], axis=1)  # (B, sum(k_t))
    B, d_raw = x_cat.shape
    d_pad = prep["d_pad"]
    # lane-dense (B, 128), bf16 for a single-pass MXU matmul (accumulation stays f32 in-kernel)
    x_cat = jnp.pad(x_cat, ((0, 0), (0, d_pad - d_raw))).astype(jnp.bfloat16)

    R, H, E = prep["reward_channels"], prep["hidden"], prep["embed"]
    T = len(prep["partition"])

    smem = pl.BlockSpec(memory_space=pltpu.MemorySpace.SMEM)
    vmem = pl.BlockSpec(memory_space=pltpu.MemorySpace.VMEM)

    if agg == "avg":
        kernel = functools.partial(_avg_folded_kernel, hidden=H, reward_channels=R)
        return pl.pallas_call(
            kernel,
            out_shape=jax.ShapeDtypeStruct((B, R), jnp.float32),
            in_specs=[smem, vmem, vmem, vmem, vmem],
            out_specs=vmem,
        )(prep["b2"], x_cat, prep["w_fold"], prep["b_fold"], prep["w2_flat"])
    elif agg == "max":
        kernel = functools.partial(_max_kernel, num_tokens=T, embed=E, reward_channels=R)
        return pl.pallas_call(
            kernel,
            out_shape=jax.ShapeDtypeStruct((B, R), jnp.float32),
            in_specs=[smem, smem, vmem, vmem, vmem, vmem, vmem, vmem],
            out_specs=vmem,
        )(prep["attn"], prep["b2"], x_cat, prep["w_bd"], prep["b_cat"],
          prep["w1"], prep["b1"], prep["w2"])
    else:
        raise ValueError(f"unknown agg: {agg}")


# ----------------------------------------------------------------------------
# Pure-JAX reference (matches the PyTorch semantics) for verification
# ----------------------------------------------------------------------------
def reference_forward(raw, obs_parts, skill_parts, action_parts, agg, max_dim):
    parts = list(skill_parts) + list(obs_parts) + list(action_parts)
    padded = jnp.stack(
        [jnp.pad(p, ((0, 0), (0, max_dim - p.shape[1]))) for p in parts], axis=0
    ).astype(jnp.float32)                                                    # (T, B, max_dim)
    x = jnp.einsum("tbd,ted->tbe", padded, raw["enc_w"],
                   precision="highest") + raw["enc_b"][:, None, :]
    x = jnp.swapaxes(x, 0, 1)                                                # (B, T, E)
    attn = jax.nn.softmax(raw["attn_logit"], axis=-1)                        # (R, T)
    if agg == "max":
        feats = jnp.max(x[:, None, :, :] * attn[None, :, :, None], axis=2)   # (B, R, E)
    else:
        feats = jnp.einsum("bte,rt->bre", x, attn, precision="highest")      # (B, R, E)
    h = jnp.einsum("bre,rhe->brh", feats, raw["vh_w1"],
                   precision="highest") + raw["vh_b1"][None]
    h = jnp.maximum(h, 0.0)
    v = jnp.einsum("brh,rh->br", h, raw["vh_w2"],
                   precision="highest") + raw["vh_b2"][None]
    return v                                                                 # (B, R)


# ----------------------------------------------------------------------------
# Main
# ----------------------------------------------------------------------------
if __name__ == "__main__":
    key = jax.random.PRNGKey(0)

    # --- synthetic environment factorization (get_env_factorization stand-in) ---
    B = 8
    skill_channels = 3                 # R (separate_sac_reward assumed False)
    skill_dim = 6
    skill_partition = [skill_dim // skill_channels] * skill_channels  # [2, 2, 2]
    obs_partition = [5, 3, 4]
    action_partition = [2]
    all_tokens = skill_partition + obs_partition + action_partition
    T = len(all_tokens)                # num_tokens = 7
    max_dim = max(all_tokens)          # 5
    E = 256                            # embed_size (fixed by the module)
    H = 512                            # hidden_size (fixed by the module)
    R = skill_channels

    # --- deterministic parameter init (torch-equivalent layouts) ---
    ks = jax.random.split(key, 10)
    raw = {
        "enc_w": 0.05 * jax.random.normal(ks[0], (T, E, max_dim), jnp.float32),
        "enc_b": 0.05 * jax.random.normal(ks[1], (T, E), jnp.float32),
        "attn_logit": jax.random.normal(ks[2], (R, T), jnp.float32),
        "vh_w1": 0.05 * jax.random.normal(ks[3], (R, H, E), jnp.float32),
        "vh_b1": 0.05 * jax.random.normal(ks[4], (R, H), jnp.float32),
        "vh_w2": 0.05 * jax.random.normal(ks[5], (R, H), jnp.float32),
        "vh_b2": 0.05 * jax.random.normal(ks[6], (R,), jnp.float32),
    }
    prep = prepare_params(raw, all_tokens, d_pad=128)

    # --- deterministic example inputs (lists of [B, k] factor observations) ---
    ik = jax.random.split(ks[7], T)
    skill_parts = [jax.random.normal(ik[i], (B, skill_partition[i]), jnp.float32)
                   for i in range(len(skill_partition))]
    obs_parts = [jax.random.normal(ik[len(skill_partition) + i], (B, obs_partition[i]), jnp.float32)
                 for i in range(len(obs_partition))]
    action_parts = [jax.random.normal(ik[len(skill_partition) + len(obs_partition) + i],
                                      (B, action_partition[i]), jnp.float32)
                    for i in range(len(action_partition))]

    for agg in ("avg", "max"):
        out = simple_attn_critic_forward(prep, obs_parts, skill_parts, action_parts, agg)
        out = jax.block_until_ready(out)
        ref = reference_forward(raw, obs_parts, skill_parts, action_parts, agg, max_dim)
        # tolerance re-validated for bf16 MXU operands (f32 accumulation / f32 VPU math)
        np.testing.assert_allclose(np.asarray(out), np.asarray(ref), rtol=5e-3, atol=5e-3)
        assert out.shape == (B, R)

    print("KERNEL_OK")
</pallas_src>

<mosaic_0001>
module attributes {stable_mosaic.version = 11 : i64} {
  func.func @_avg_folded_kernel(%arg0: memref<3xf32, #tpu.memory_space<smem>>, %arg1: memref<8x128xbf16, #tpu.memory_space<vmem>>, %arg2: memref<128x1536xbf16, #tpu.memory_space<vmem>>, %arg3: memref<1x1536xf32, #tpu.memory_space<vmem>>, %arg4: memref<1x1536xf32, #tpu.memory_space<vmem>>, %arg5: memref<8x3xf32, #tpu.memory_space<vmem>>) attributes {dimension_semantics = [], scalar_prefetch = 0 : i64, scratch_operands = 0 : i64, tpu.core_type = #tpu.core_type<tc>} {
    %c0 = arith.constant 0 : index
    %c0_0 = arith.constant 0 : index
    %0 = vector.load %arg1[%c0, %c0_0] : memref<8x128xbf16, #tpu.memory_space<vmem>>, vector<8x128xbf16>
    %c0_1 = arith.constant 0 : index
    %c0_2 = arith.constant 0 : index
    %1 = vector.load %arg2[%c0_1, %c0_2] : memref<128x1536xbf16, #tpu.memory_space<vmem>>, vector<128x1536xbf16>
    %cst = arith.constant dense<0.000000e+00> : vector<8x1536xf32>
    %2 = tpu.matmul %0, %1, %cst {dimension_numbers = #tpu.dot_dimension_numbers<[1], [0], [0], [1], [0, 0, 1, 1], [], []>} : vector<8x128xbf16>, vector<128x1536xbf16>, vector<8x1536xf32> -> vector<8x1536xf32>
    %c0_3 = arith.constant 0 : index
    %c0_4 = arith.constant 0 : index
    %3 = vector.load %arg3[%c0_3, %c0_4] : memref<1x1536xf32, #tpu.memory_space<vmem>>, vector<1x1536xf32>
    %4 = vector.broadcast %3 : vector<1x1536xf32> to vector<8x1536xf32>
    %5 = arith.addf %2, %4 : vector<8x1536xf32>
    %cst_5 = arith.constant 0.000000e+00 : f32
    %6 = vector.broadcast %cst_5 : f32 to vector<8x1536xf32>
    %7 = arith.maximumf %5, %6 : vector<8x1536xf32>
    %c0_6 = arith.constant 0 : index
    %c0_7 = arith.constant 0 : index
    %8 = vector.load %arg4[%c0_6, %c0_7] : memref<1x1536xf32, #tpu.memory_space<vmem>>, vector<1x1536xf32>
    %9 = vector.broadcast %8 : vector<1x1536xf32> to vector<8x1536xf32>
    %10 = arith.mulf %7, %9 : vector<8x1536xf32>
    %11 = vector.extract_strided_slice %10 {offsets = [0, 0], sizes = [8, 512], strides = [1, 1]} : vector<8x1536xf32> to vector<8x512xf32>
    %cst_8 = arith.constant dense<0.000000e+00> : vector<8xf32>
    %12 = vector.multi_reduction <add>, %11, %cst_8 [1] : vector<8x512xf32> to vector<8xf32>
    %13 = vector.shape_cast %12 : vector<8xf32> to vector<8x1xf32>
    %c0_9 = arith.constant 0 : index
    %14 = memref.load %arg0[%c0_9] : memref<3xf32, #tpu.memory_space<smem>>
    %15 = vector.broadcast %14 : f32 to vector<8x1xf32>
    %16 = arith.addf %13, %15 : vector<8x1xf32>
    %c0_10 = arith.constant 0 : index
    %c0_11 = arith.constant 0 : index
    %17 = vector.load %arg5[%c0_10, %c0_11] : memref<8x3xf32, #tpu.memory_space<vmem>>, vector<8x1xf32>
    tpu.vector_store %arg5[%c0_10, %c0_11], %16 {strides = array<i32>} : memref<8x3xf32, #tpu.memory_space<vmem>>, vector<8x1xf32>,
    %18 = vector.extract_strided_slice %10 {offsets = [0, 512], sizes = [8, 512], strides = [1, 1]} : vector<8x1536xf32> to vector<8x512xf32>
    %cst_12 = arith.constant dense<0.000000e+00> : vector<8xf32>
    %19 = vector.multi_reduction <add>, %18, %cst_12 [1] : vector<8x512xf32> to vector<8xf32>
    %20 = vector.shape_cast %19 : vector<8xf32> to vector<8x1xf32>
    %c1 = arith.constant 1 : index
    %21 = memref.load %arg0[%c1] : memref<3xf32, #tpu.memory_space<smem>>
    %22 = vector.broadcast %21 : f32 to vector<8x1xf32>
    %23 = arith.addf %20, %22 : vector<8x1xf32>
    %c0_13 = arith.constant 0 : index
    %c1_14 = arith.constant 1 : index
    %24 = vector.load %arg5[%c0_13, %c1_14] : memref<8x3xf32, #tpu.memory_space<vmem>>, vector<8x1xf32>
    tpu.vector_store %arg5[%c0_13, %c1_14], %23 {strides = array<i32>} : memref<8x3xf32, #tpu.memory_space<vmem>>, vector<8x1xf32>,
    %25 = vector.extract_strided_slice %10 {offsets = [0, 1024], sizes = [8, 512], strides = [1, 1]} : vector<8x1536xf32> to vector<8x512xf32>
    %cst_15 = arith.constant dense<0.000000e+00> : vector<8xf32>
    %26 = vector.multi_reduction <add>, %25, %cst_15 [1] : vector<8x512xf32> to vector<8xf32>
    %27 = vector.shape_cast %26 : vector<8xf32> to vector<8x1xf32>
    %c2 = arith.constant 2 : index
    %28 = memref.load %arg0[%c2] : memref<3xf32, #tpu.memory_space<smem>>
    %29 = vector.broadcast %28 : f32 to vector<8x1xf32>
    %30 = arith.addf %27, %29 : vector<8x1xf32>
    %c0_16 = arith.constant 0 : index
    %c2_17 = arith.constant 2 : index
    %31 = vector.load %arg5[%c0_16, %c2_17] : memref<8x3xf32, #tpu.memory_space<vmem>>, vector<8x1xf32>
    tpu.vector_store %arg5[%c0_16, %c2_17], %30 {strides = array<i32>} : memref<8x3xf32, #tpu.memory_space<vmem>>, vector<8x1xf32>,
    return
  }
}

</mosaic_0001>

<llo_original>
// kernel: tpu_custom_call.1
$region0: #{tpu_custom_call.1}
  #allocation0 [shape = 'u32[]', space=smem, size = 0x4, offset = 0x4, fixed_abs, tag = 'smem constant byte address 0x4 - core index']
  #allocation1 [shape = 'u32[144,128]{1,0:T(1,128)}', space=vmem, size = 0x12000, scoped, tag = 'internal scratch']
  %s0 = inlined_call_operand.hbm [shape: f32[3], index: 0, kind: input, shape index: {}]
  %s1 = inlined_call_operand.hbm [shape: bf16[8,128], index: 1, kind: input, shape index: {}]
  %s2 = inlined_call_operand.hbm [shape: bf16[128,1536], index: 2, kind: input, shape index: {}]
  %s3 = inlined_call_operand.hbm [shape: f32[1,1536], index: 3, kind: input, shape index: {}]
  %s4 = inlined_call_operand.hbm [shape: f32[1,1536], index: 4, kind: input, shape index: {}]
  %s5 = inlined_call_operand.vmem [shape: f32[8,3], index: 5, kind: output, shape index: {}]
  %s6 = sld [smem:[#allocation0]]
  $region50: #{tpu_custom_call.1} parent=0
    _
  %s8 = ssub.s32 1, %s6
  %s9 = scalar_select 0, %s8, %s6
  $region1: #{tpu_custom_call.1} parent=0
    #allocation2 [shape = 'u8[512]{0}', space=smem, size = 0x200, scoped, tag = 'input window, operand 0, single buffered']
    #allocation3 [shape = 's32[1]{0}', space=sflag, size = 0x4, scoped, tag = 'scoped memory for tpu_custom_call.1']
    #allocation4 [shape = 's32[1]{0}', space=sflag, size = 0x4, scoped, tag = 'scoped memory for tpu_custom_call.1']
    #allocation5 [shape = 'u8[2048]{0}', space=vmem, size = 0x800, scoped, tag = 'input window, operand 1, single buffered']
    #allocation6 [shape = 'u8[393216]{0}', space=vmem, size = 0x60000, scoped, tag = 'input window, operand 2, single buffered']
    #allocation7 [shape = 's32[1]{0}', space=sflag, size = 0x4, scoped, tag = 'scoped memory for tpu_custom_call.1']
    #allocation8 [shape = 'u8[6144]{0}', space=vmem, size = 0x1800, scoped, tag = 'input window, operand 3, single buffered']
    #allocation9 [shape = 'u8[6144]{0}', space=vmem, size = 0x1800, scoped, tag = 'input window, operand 4, single buffered']
    #allocation10 [shape = 's32[1]{0}', space=sflag, size = 0x4, scoped, tag = 'scoped memory for tpu_custom_call.1']
    %10 = vsyncpa [#allocation4], 0
    %11 = vsyncpa [#allocation3], 0
    %12 = vsyncpa [#allocation7], 0
    %13 = vsyncpa [#allocation10], 0
    // Predicated region
    $region2: #{tpu_custom_call.1} parent=1 // pred_check
      _
    $region3: #{tpu_custom_call.1} parent=1 // pred_check_branch
      %15 = sbr.rel (0) target = $region5
    $region4: #{tpu_custom_call.1} parent=1 // pred_region
      %s17 = ssub.s32 16, 16
      %18 = vsyncadd [#allocation4], %s17
      %21 = dma.hbm_to_smem %s0, 16, [#allocation2], [#allocation4]
    $region5: #{tpu_custom_call.1} parent=1 // pred_fallthru
      _
    // Predicated region
    $region6: #{tpu_custom_call.1} parent=1 // pred_check
      _
    $region7: #{tpu_custom_call.1} parent=1 // pred_check_branch
      %23 = sbr.rel (0) target = $region9
    $region8: #{tpu_custom_call.1} parent=1 // pred_region
      %s25 = ssub.s32 64, 64
      %26 = vsyncadd [#allocation3], %s25
      %s28 = sshll.u32 [#allocation5], 4
      %s29 = int_to_ptr.vmem [resolvable:$true] %s28
      %31 = dma.hbm_to_vmem [thread:$0]  %s1, 64, %s29, [#allocation3]
    $region9: #{tpu_custom_call.1} parent=1 // pred_fallthru
      _
    // Predicated region
    $region10: #{tpu_custom_call.1} parent=1 // pred_check
      _
    $region11: #{tpu_custom_call.1} parent=1 // pred_check_branch
      %33 = sbr.rel (0) target = $region13
    $region12: #{tpu_custom_call.1} parent=1 // pred_region
      %s35 = ssub.s32 12288, 12288
      %36 = vsyncadd [#allocation7], %s35
      %s37 = sshll.u32 [#allocation6], 4
      %s38 = int_to_ptr.vmem [resolvable:$true] %s37
      %43 = dma.hbm_to_vmem [thread:$0]  %s2, 12288, %s38, [#allocation7], 768, 768, 48
    $region13: #{tpu_custom_call.1} parent=1 // pred_fallthru
      _
    // Predicated region
    $region14: #{tpu_custom_call.1} parent=1 // pred_check
      _
    $region15: #{tpu_custom_call.1} parent=1 // pred_check_branch
      %45 = sbr.rel (0) target = $region17
    $region16: #{tpu_custom_call.1} parent=1 // pred_region
      %s47 = ssub.s32 192, 192
      %48 = vsyncadd [#allocation7], %s47
      %s50 = sshll.u32 [#allocation8], 4
      %s51 = int_to_ptr.vmem [resolvable:$true] %s50
      %53 = dma.hbm_to_vmem [thread:$0]  %s3, 192, %s51, [#allocation7]
    $region17: #{tpu_custom_call.1} parent=1 // pred_fallthru
      _
    // Predicated region
    $region18: #{tpu_custom_call.1} parent=1 // pred_check
      _
    $region19: #{tpu_custom_call.1} parent=1 // pred_check_branch
      %55 = sbr.rel (0) target = $region21
    $region20: #{tpu_custom_call.1} parent=1 // pred_region
      %s57 = ssub.s32 192, 192
      %58 = vsyncadd [#allocation10], %s57
      %s60 = sshll.u32 [#allocation9], 4
      %s61 = int_to_ptr.vmem [resolvable:$true] %s60
      %63 = dma.hbm_to_vmem [thread:$0]  %s4, 192, %s61, [#allocation10]
    $region21: #{tpu_custom_call.1} parent=1 // pred_fallthru
      _
    // Predicated region
    $region22: #{tpu_custom_call.1} parent=1 // pred_check
      _
    $region23: #{tpu_custom_call.1} parent=1 // pred_check_branch
      %65 = sbr.rel (0) target = $region25
    $region24: #{tpu_custom_call.1} parent=1 // pred_region
      %66 = dma.done [#allocation4], 16
    $region25: #{tpu_custom_call.1} parent=1 // pred_fallthru
      _
    // Predicated region
    $region26: #{tpu_custom_call.1} parent=1 // pred_check
      _
    $region27: #{tpu_custom_call.1} parent=1 // pred_check_branch
      %68 = sbr.rel (0) target = $region29
    $region28: #{tpu_custom_call.1} parent=1 // pred_region
      %69 = dma.done [#allocation3], 64
    $region29: #{tpu_custom_call.1} parent=1 // pred_fallthru
      _
    // Predicated region
    $region30: #{tpu_custom_call.1} parent=1 // pred_check
      _
    $region31: #{tpu_custom_call.1} parent=1 // pred_check_branch
      %71 = sbr.rel (0) target = $region33
    $region32: #{tpu_custom_call.1} parent=1 // pred_region
      %72 = dma.done [#allocation7], 12288
    $region33: #{tpu_custom_call.1} parent=1 // pred_fallthru
      _
    // Predicated region
    $region34: #{tpu_custom_call.1} parent=1 // pred_check
      _
    $region35: #{tpu_custom_call.1} parent=1 // pred_check_branch
      %74 = sbr.rel (0) target = $region37
    $region36: #{tpu_custom_call.1} parent=1 // pred_region
      %75 = dma.done [#allocation7], 192
    $region37: #{tpu_custom_call.1} parent=1 // pred_fallthru
      _
    // Predicated region
    $region38: #{tpu_custom_call.1} parent=1 // pred_check
      _
    $region39: #{tpu_custom_call.1} parent=1 // pred_check_branch
      %77 = sbr.rel (0) target = $region41
    $region40: #{tpu_custom_call.1} parent=1 // pred_region
      %78 = dma.done [#allocation10], 192
    $region41: #{tpu_custom_call.1} parent=1 // pred_fallthru
      _
    %79 = sfence
    %v81 = vld [vmem:[#allocation5] sm:$0xf]
    %v82 = vld [vmem:[#allocation6] sm:$0xff]
    %v83 = vld [vmem:[#allocation6 + $0x8] sm:$0xff]
    %v84 = vld [vmem:[#allocation6 + $0x10] sm:$0xff]
    %v85 = vld [vmem:[#allocation6 + $0x18] sm:$0xff]
    %v86 = vld [vmem:[#allocation6 + $0x20] sm:$0xff]
    %v87 = vld [vmem:[#allocation6 + $0x28] sm:$0xff]
    %v88 = vld [vmem:[#allocation6 + $0x30] sm:$0xff]
    %v89 = vld [vmem:[#allocation6 + $0x38] sm:$0xff]
    %v90 = vld [vmem:[#allocation6 + $0x40] sm:$0xff]
    %v91 = vld [vmem:[#allocation6 + $0x48] sm:$0xff]
    %v92 = vld [vmem:[#allocation6 + $0x50] sm:$0xff]
    %v93 = vld [vmem:[#allocation6 + $0x58] sm:$0xff]
    %v94 = vld [vmem:[#allocation6 + $0x60] sm:$0xff]
    %v95 = vld [vmem:[#allocation6 + $0x68] sm:$0xff]
    %v96 = vld [vmem:[#allocation6 + $0x70] sm:$0xff]
    %v97 = vld [vmem:[#allocation6 + $0x78] sm:$0xff]
    %v98 = vld [vmem:[#allocation6 + $0x80] sm:$0xff]
    %v99 = vld [vmem:[#allocation6 + $0x88] sm:$0xff]
    %v100 = vld [vmem:[#allocation6 + $0x90] sm:$0xff]
    %v101 = vld [vmem:[#allocation6 + $0x98] sm:$0xff]
    %v102 = vld [vmem:[#allocation6 + $0xa0] sm:$0xff]
    %v103 = vld [vmem:[#allocation6 + $0xa8] sm:$0xff]
    %v104 = vld [vmem:[#allocation6 + $0xb0] sm:$0xff]
    %v105 = vld [vmem:[#allocation6 + $0xb8] sm:$0xff]
    %v106 = vld [vmem:[#allocation6 + $0xc0] sm:$0xff]
    %v107 = vld [vmem:[#allocation6 + $0xc8] sm:$0xff]
    %v108 = vld [vmem:[#allocation6 + $0xd0] sm:$0xff]
    %v109 = vld [vmem:[#allocation6 + $0xd8] sm:$0xff]
    %v110 = vld [vmem:[#allocation6 + $0xe0] sm:$0xff]
    %v111 = vld [vmem:[#allocation6 + $0xe8] sm:$0xff]
    %v112 = vld [vmem:[#allocation6 + $0xf0] sm:$0xff]
    %v113 = vld [vmem:[#allocation6 + $0xf8] sm:$0xff]
    %v114 = vld [vmem:[#allocation6 + $0x100] sm:$0xff]
    %v115 = vld [vmem:[#allocation6 + $0x108] sm:$0xff]
    %v116 = vld [vmem:[#allocation6 + $0x110] sm:$0xff]
    %v117 = vld [vmem:[#allocation6 + $0x118] sm:$0xff]
    %v118 = vld [vmem:[#allocation6 + $0x120] sm:$0xff]
    %v119 = vld [vmem:[#allocation6 + $0x128] sm:$0xff]
    %v120 = vld [vmem:[#allocation6 + $0x130] sm:$0xff]
    %v121 = vld [vmem:[#allocation6 + $0x138] sm:$0xff]
    %v122 = vld [vmem:[#allocation6 + $0x140] sm:$0xff]
    %v123 = vld [vmem:[#allocation6 + $0x148] sm:$0xff]
    %v124 = vld [vmem:[#allocation6 + $0x150] sm:$0xff]
    %v125 = vld [vmem:[#allocation6 + $0x158] sm:$0xff]
    %v126 = vld [vmem:[#allocation6 + $0x160] sm:$0xff]
    %v127 = vld [vmem:[#allocation6 + $0x168] sm:$0xff]
    %v128 = vld [vmem:[#allocation6 + $0x170] sm:$0xff]
    %v129 = vld [vmem:[#allocation6 + $0x178] sm:$0xff]
    %v130 = vld [vmem:[#allocation6 + $0x180] sm:$0xff]
    %v131 = vld [vmem:[#allocation6 + $0x188] sm:$0xff]
    %v132 = vld [vmem:[#allocation6 + $0x190] sm:$0xff]
    %v133 = vld [vmem:[#allocation6 + $0x198] sm:$0xff]
    %v134 = vld [vmem:[#allocation6 + $0x1a0] sm:$0xff]
    %v135 = vld [vmem:[#allocation6 + $0x1a8] sm:$0xff]
    %v136 = vld [vmem:[#allocation6 + $0x1b0] sm:$0xff]
    %v137 = vld [vmem:[#allocation6 + $0x1b8] sm:$0xff]
    %v138 = vld [vmem:[#allocation6 + $0x1c0] sm:$0xff]
    %v139 = vld [vmem:[#allocation6 + $0x1c8] sm:$0xff]
    %v140 = vld [vmem:[#allocation6 + $0x1d0] sm:$0xff]
    %v141 = vld [vmem:[#allocation6 + $0x1d8] sm:$0xff]
    %v142 = vld [vmem:[#allocation6 + $0x1e0] sm:$0xff]
    %v143 = vld [vmem:[#allocation6 + $0x1e8] sm:$0xff]
    %v144 = vld [vmem:[#allocation6 + $0x1f0] sm:$0xff]
    %v145 = vld [vmem:[#allocation6 + $0x1f8] sm:$0xff]
    %v146 = vld [vmem:[#allocation6 + $0x200] sm:$0xff]
    %v147 = vld [vmem:[#allocation6 + $0x208] sm:$0xff]
    %v148 = vld [vmem:[#allocation6 + $0x210] sm:$0xff]
    %v149 = vld [vmem:[#allocation6 + $0x218] sm:$0xff]
    %v150 = vld [vmem:[#allocation6 + $0x220] sm:$0xff]
    %v151 = vld [vmem:[#allocation6 + $0x228] sm:$0xff]
    %v152 = vld [vmem:[#allocation6 + $0x230] sm:$0xff]
    %v153 = vld [vmem:[#allocation6 + $0x238] sm:$0xff]
    %v154 = vld [vmem:[#allocation6 + $0x240] sm:$0xff]
    %v155 = vld [vmem:[#allocation6 + $0x248] sm:$0xff]
    %v156 = vld [vmem:[#allocation6 + $0x250] sm:$0xff]
    %v157 = vld [vmem:[#allocation6 + $0x258] sm:$0xff]
    %v158 = vld [vmem:[#allocation6 + $0x260] sm:$0xff]
    %v159 = vld [vmem:[#allocation6 + $0x268] sm:$0xff]
    %v160 = vld [vmem:[#allocation6 + $0x270] sm:$0xff]
    %v161 = vld [vmem:[#allocation6 + $0x278] sm:$0xff]
    %v162 = vld [vmem:[#allocation6 + $0x280] sm:$0xff]
    %v163 = vld [vmem:[#allocation6 + $0x288] sm:$0xff]
    %v164 = vld [vmem:[#allocation6 + $0x290] sm:$0xff]
    %v165 = vld [vmem:[#allocation6 + $0x298] sm:$0xff]
    %v166 = vld [vmem:[#allocation6 + $0x2a0] sm:$0xff]
    %v167 = vld [vmem:[#allocation6 + $0x2a8] sm:$0xff]
    %v168 = vld [vmem:[#allocation6 + $0x2b0] sm:$0xff]
    %v169 = vld [vmem:[#allocation6 + $0x2b8] sm:$0xff]
    %v170 = vld [vmem:[#allocation6 + $0x2c0] sm:$0xff]
    %v171 = vld [vmem:[#allocation6 + $0x2c8] sm:$0xff]
    %v172 = vld [vmem:[#allocation6 + $0x2d0] sm:$0xff]
    %v173 = vld [vmem:[#allocation6 + $0x2d8] sm:$0xff]
    %v174 = vld [vmem:[#allocation6 + $0x2e0] sm:$0xff]
    %v175 = vld [vmem:[#allocation6 + $0x2e8] sm:$0xff]
    %v176 = vld [vmem:[#allocation6 + $0x2f0] sm:$0xff]
    %v177 = vld [vmem:[#allocation6 + $0x2f8] sm:$0xff]
    %v178 = vld [vmem:[#allocation8] sm:$0xff]
    %v179 = vld [vmem:[#allocation8 + $0x8] sm:$0xf]
    %v182 = vlaneseq
    %v183 = vshrl.u32 %v182, 7
    %v184 = vsub.s32 0, %v183
    %v185 = vrot.slane %v178, %v184
    %v186 = vlaneseq
    %v187 = vshrl.u32 %v186, 7
    %v188 = vsub.s32 1, %v187
    %v189 = vrot.slane %v178, %v188
    %v190 = vlaneseq
    %v191 = vshrl.u32 %v190, 7
    %v192 = vsub.s32 2, %v191
    %v193 = vrot.slane %v178, %v192
    %v194 = vlaneseq
    %v195 = vshrl.u32 %v194, 7
    %v196 = vsub.s32 3, %v195
    %v197 = vrot.slane %v178, %v196
    %v198 = vlaneseq
    %v199 = vshrl.u32 %v198, 7
    %v200 = vsub.s32 4, %v199
    %v201 = vrot.slane %v178, %v200
    %v202 = vlaneseq
    %v203 = vshrl.u32 %v202, 7
    %v204 = vsub.s32 5, %v203
    %v205 = vrot.slane %v178, %v204
    %v206 = vlaneseq
    %v207 = vshrl.u32 %v206, 7
    %v208 = vsub.s32 6, %v207
    %v209 = vrot.slane %v178, %v208
    %v210 = vlaneseq
    %v211 = vshrl.u32 %v210, 7
    %v212 = vsub.s32 7, %v211
    %v213 = vrot.slane %v178, %v212
    %v214 = vlaneseq
    %v215 = vshrl.u32 %v214, 7
    %v216 = vsub.s32 0, %v215
    %v217 = vrot.slane %v179, %v216
    %v218 = vlaneseq
    %v219 = vshrl.u32 %v218, 7
    %v220 = vsub.s32 1, %v219
    %v221 = vrot.slane %v179, %v220
    %v222 = vlaneseq
    %v223 = vshrl.u32 %v222, 7
    %v224 = vsub.s32 2, %v223
    %v225 = vrot.slane %v179, %v224
    %v226 = vlaneseq
    %v227 = vshrl.u32 %v226, 7
    %v228 = vsub.s32 3, %v227
    %v229 = vrot.slane %v179, %v228
    %v338 = vunpack.c.l.b16 %v82
    %v339 = vunpack.c.h.b16 %v82
    %v340 = vunpack.c.l.b16 %v83
    %v341 = vunpack.c.h.b16 %v83
    %v342 = vunpack.c.l.b16 %v84
    %v343 = vunpack.c.h.b16 %v84
    %v344 = vunpack.c.l.b16 %v85
    %v345 = vunpack.c.h.b16 %v85
    %v346 = vunpack.c.l.b16 %v86
    %v347 = vunpack.c.h.b16 %v86
    %v348 = vunpack.c.l.b16 %v87
    %v349 = vunpack.c.h.b16 %v87
    %v350 = vunpack.c.l.b16 %v88
    %v351 = vunpack.c.h.b16 %v88
    %v352 = vunpack.c.l.b16 %v89
    %v353 = vunpack.c.h.b16 %v89
    %v354 = vunpack.c.l.b16 %v90
    %v355 = vunpack.c.h.b16 %v90
    %v356 = vunpack.c.l.b16 %v91
    %v357 = vunpack.c.h.b16 %v91
    %v358 = vunpack.c.l.b16 %v92
    %v359 = vunpack.c.h.b16 %v92
    %v360 = vunpack.c.l.b16 %v93
    %v361 = vunpack.c.h.b16 %v93
    %v362 = vunpack.c.l.b16 %v94
    %v363 = vunpack.c.h.b16 %v94
    %v364 = vunpack.c.l.b16 %v95
    %v365 = vunpack.c.h.b16 %v95
    %v366 = vunpack.c.l.b16 %v96
    %v367 = vunpack.c.h.b16 %v96
    %v368 = vunpack.c.l.b16 %v97
    %v369 = vunpack.c.h.b16 %v97
    %v370 = vunpack.c.l.b16 %v98
    %v371 = vunpack.c.h.b16 %v98
    %v372 = vunpack.c.l.b16 %v99
    %v373 = vunpack.c.h.b16 %v99
    %v374 = vunpack.c.l.b16 %v100
    %v375 = vunpack.c.h.b16 %v100
    %v376 = vunpack.c.l.b16 %v101
    %v377 = vunpack.c.h.b16 %v101
    %v378 = vunpack.c.l.b16 %v102
    %v379 = vunpack.c.h.b16 %v102
    %v380 = vunpack.c.l.b16 %v103
    %v381 = vunpack.c.h.b16 %v103
    %v382 = vunpack.c.l.b16 %v104
    %v383 = vunpack.c.h.b16 %v104
    %v384 = vunpack.c.l.b16 %v105
    %v385 = vunpack.c.h.b16 %v105
    %v386 = vunpack.c.l.b16 %v106
    %v387 = vunpack.c.h.b16 %v106
    %v388 = vunpack.c.l.b16 %v107
    %v389 = vunpack.c.h.b16 %v107
    %v390 = vunpack.c.l.b16 %v108
    %v391 = vunpack.c.h.b16 %v108
    %v392 = vunpack.c.l.b16 %v109
    %v393 = vunpack.c.h.b16 %v109
    %v394 = vunpack.c.l.b16 %v110
    %v395 = vunpack.c.h.b16 %v110
    %v396 = vunpack.c.l.b16 %v111
    %v397 = vunpack.c.h.b16 %v111
    %v398 = vunpack.c.l.b16 %v112
    %v399 = vunpack.c.h.b16 %v112
    %v400 = vunpack.c.l.b16 %v113
    %v401 = vunpack.c.h.b16 %v113
    %v402 = vunpack.c.l.b16 %v114
    %v403 = vunpack.c.h.b16 %v114
    %v404 = vunpack.c.l.b16 %v115
    %v405 = vunpack.c.h.b16 %v115
    %v406 = vunpack.c.l.b16 %v116
    %v407 = vunpack.c.h.b16 %v116
    %v408 = vunpack.c.l.b16 %v117
    %v409 = vunpack.c.h.b16 %v117
    %v410 = vunpack.c.l.b16 %v118
    %v411 = vunpack.c.h.b16 %v118
    %v412 = vunpack.c.l.b16 %v119
    %v413 = vunpack.c.h.b16 %v119
    %v414 = vunpack.c.l.b16 %v120
    %v415 = vunpack.c.h.b16 %v120
    %v416 = vunpack.c.l.b16 %v121
    %v417 = vunpack.c.h.b16 %v121
    %v418 = vunpack.c.l.b16 %v122
    %v419 = vunpack.c.h.b16 %v122
    %v420 = vunpack.c.l.b16 %v123
    %v421 = vunpack.c.h.b16 %v123
    %v422 = vunpack.c.l.b16 %v124
    %v423 = vunpack.c.h.b16 %v124
    %v424 = vunpack.c.l.b16 %v125
    %v425 = vunpack.c.h.b16 %v125
    %v426 = vunpack.c.l.b16 %v126
    %v427 = vunpack.c.h.b16 %v126
    %v428 = vunpack.c.l.b16 %v127
    %v429 = vunpack.c.h.b16 %v127
    %v430 = vunpack.c.l.b16 %v128
    %v431 = vunpack.c.h.b16 %v128
    %v432 = vunpack.c.l.b16 %v129
    %v433 = vunpack.c.h.b16 %v129
    %v434 = vunpack.c.l.b16 %v130
    %v435 = vunpack.c.h.b16 %v130
    %v436 = vunpack.c.l.b16 %v131
    %v437 = vunpack.c.h.b16 %v131
    %v438 = vunpack.c.l.b16 %v132
    %v439 = vunpack.c.h.b16 %v132
    %v440 = vunpack.c.l.b16 %v133
    %v441 = vunpack.c.h.b16 %v133
    %v442 = vunpack.c.l.b16 %v134
    %v443 = vunpack.c.h.b16 %v134
    %v444 = vunpack.c.l.b16 %v135
    %v445 = vunpack.c.h.b16 %v135
    %v446 = vunpack.c.l.b16 %v136
    %v447 = vunpack.c.h.b16 %v136
    %v448 = vunpack.c.l.b16 %v137
    %v449 = vunpack.c.h.b16 %v137
    %v450 = vunpack.c.l.b16 %v138
    %v451 = vunpack.c.h.b16 %v138
    %v452 = vunpack.c.l.b16 %v139
    %v453 = vunpack.c.h.b16 %v139
    %v454 = vunpack.c.l.b16 %v140
    %v455 = vunpack.c.h.b16 %v140
    %v456 = vunpack.c.l.b16 %v141
    %v457 = vunpack.c.h.b16 %v141
    %v458 = vunpack.c.l.b16 %v142
    %v459 = vunpack.c.h.b16 %v142
    %v460 = vunpack.c.l.b16 %v143
    %v461 = vunpack.c.h.b16 %v143
    %v462 = vunpack.c.l.b16 %v144
    %v463 = vunpack.c.h.b16 %v144
    %v464 = vunpack.c.l.b16 %v145
    %v465 = vunpack.c.h.b16 %v145
    %v466 = vunpack.c.l.b16 %v146
    %v467 = vunpack.c.h.b16 %v146
    %v468 = vunpack.c.l.b16 %v147
    %v469 = vunpack.c.h.b16 %v147
    %v470 = vunpack.c.l.b16 %v148
    %v471 = vunpack.c.h.b16 %v148
    %v472 = vunpack.c.l.b16 %v149
    %v473 = vunpack.c.h.b16 %v149
    %v474 = vunpack.c.l.b16 %v150
    %v475 = vunpack.c.h.b16 %v150
    %v476 = vunpack.c.l.b16 %v151
    %v477 = vunpack.c.h.b16 %v151
    %v478 = vunpack.c.l.b16 %v152
    %v479 = vunpack.c.h.b16 %v152
    %v480 = vunpack.c.l.b16 %v153
    %v481 = vunpack.c.h.b16 %v153
    %v482 = vunpack.c.l.b16 %v154
    %v483 = vunpack.c.h.b16 %v154
    %v484 = vunpack.c.l.b16 %v155
    %v485 = vunpack.c.h.b16 %v155
    %v486 = vunpack.c.l.b16 %v156
    %v487 = vunpack.c.h.b16 %v156
    %v488 = vunpack.c.l.b16 %v157
    %v489 = vunpack.c.h.b16 %v157
    %v490 = vunpack.c.l.b16 %v158
    %v491 = vunpack.c.h.b16 %v158
    %v492 = vunpack.c.l.b16 %v159
    %v493 = vunpack.c.h.b16 %v159
    %v494 = vunpack.c.l.b16 %v160
    %v495 = vunpack.c.h.b16 %v160
    %v496 = vunpack.c.l.b16 %v161
    %v497 = vunpack.c.h.b16 %v161
    %v498 = vunpack.c.l.b16 %v162
    %v499 = vunpack.c.h.b16 %v162
    %v500 = vunpack.c.l.b16 %v163
    %v501 = vunpack.c.h.b16 %v163
    %v502 = vunpack.c.l.b16 %v164
    %v503 = vunpack.c.h.b16 %v164
    %v504 = vunpack.c.l.b16 %v165
    %v505 = vunpack.c.h.b16 %v165
    %v506 = vunpack.c.l.b16 %v166
    %v507 = vunpack.c.h.b16 %v166
    %v508 = vunpack.c.l.b16 %v167
    %v509 = vunpack.c.h.b16 %v167
    %v510 = vunpack.c.l.b16 %v168
    %v511 = vunpack.c.h.b16 %v168
    %v512 = vunpack.c.l.b16 %v169
    %v513 = vunpack.c.h.b16 %v169
    %v514 = vunpack.c.l.b16 %v170
    %v515 = vunpack.c.h.b16 %v170
    %v516 = vunpack.c.l.b16 %v171
    %v517 = vunpack.c.h.b16 %v171
    %v518 = vunpack.c.l.b16 %v172
    %v519 = vunpack.c.h.b16 %v172
    %v520 = vunpack.c.l.b16 %v173
    %v521 = vunpack.c.h.b16 %v173
    %v522 = vunpack.c.l.b16 %v174
    %v523 = vunpack.c.h.b16 %v174
    %v524 = vunpack.c.l.b16 %v175
    %v525 = vunpack.c.h.b16 %v175
    %v526 = vunpack.c.l.b16 %v176
    %v527 = vunpack.c.h.b16 %v176
    %v528 = vunpack.c.l.b16 %v177
    %v529 = vunpack.c.h.b16 %v177
    %v530 = vpack.c.b16 %v350, %v338
    %v531 = vpack.c.b16 %v351, %v339
    %v532 = vpack.c.b16 %v352, %v340
    %v533 = vpack.c.b16 %v353, %v341
    %v534 = vpack.c.b16 %v354, %v342
    %v535 = vpack.c.b16 %v355, %v343
    %v536 = vpack.c.b16 %v356, %v344
    %v537 = vpack.c.b16 %v357, %v345
    %v538 = vpack.c.b16 %v358, %v346
    %v539 = vpack.c.b16 %v359, %v347
    %v540 = vpack.c.b16 %v360, %v348
    %v541 = vpack.c.b16 %v361, %v349
    %v542 = vpack.c.b16 %v374, %v362
    %v543 = vpack.c.b16 %v375, %v363
    %v544 = vpack.c.b16 %v376, %v364
    %v545 = vpack.c.b16 %v377, %v365
    %v546 = vpack.c.b16 %v378, %v366
    %v547 = vpack.c.b16 %v379, %v367
    %v548 = vpack.c.b16 %v380, %v368
    %v549 = vpack.c.b16 %v381, %v369
    %v550 = vpack.c.b16 %v382, %v370
    %v551 = vpack.c.b16 %v383, %v371
    %v552 = vpack.c.b16 %v384, %v372
    %v553 = vpack.c.b16 %v385, %v373
    %v554 = vpack.c.b16 %v398, %v386
    %v555 = vpack.c.b16 %v399, %v387
    %v556 = vpack.c.b16 %v400, %v388
    %v557 = vpack.c.b16 %v401, %v389
    %v558 = vpack.c.b16 %v402, %v390
    %v559 = vpack.c.b16 %v403, %v391
    %v560 = vpack.c.b16 %v404, %v392
    %v561 = vpack.c.b16 %v405, %v393
    %v562 = vpack.c.b16 %v406, %v394
    %v563 = vpack.c.b16 %v407, %v395
    %v564 = vpack.c.b16 %v408, %v396
    %v565 = vpack.c.b16 %v409, %v397
    %v566 = vpack.c.b16 %v422, %v410
    %v567 = vpack.c.b16 %v423, %v411
    %v568 = vpack.c.b16 %v424, %v412
    %v569 = vpack.c.b16 %v425, %v413
    %v570 = vpack.c.b16 %v426, %v414
    %v571 = vpack.c.b16 %v427, %v415
    %v572 = vpack.c.b16 %v428, %v416
    %v573 = vpack.c.b16 %v429, %v417
    %v574 = vpack.c.b16 %v430, %v418
    %v575 = vpack.c.b16 %v431, %v419
    %v576 = vpack.c.b16 %v432, %v420
    %v577 = vpack.c.b16 %v433, %v421
    %v578 = vpack.c.b16 %v446, %v434
    %v579 = vpack.c.b16 %v447, %v435
    %v580 = vpack.c.b16 %v448, %v436
    %v581 = vpack.c.b16 %v449, %v437
    %v582 = vpack.c.b16 %v450, %v438
    %v583 = vpack.c.b16 %v451, %v439
    %v584 = vpack.c.b16 %v452, %v440
    %v585 = vpack.c.b16 %v453, %v441
    %v586 = vpack.c.b16 %v454, %v442
    %v587 = vpack.c.b16 %v455, %v443
    %v588 = vpack.c.b16 %v456, %v444
    %v589 = vpack.c.b16 %v457, %v445
    %v590 = vpack.c.b16 %v470, %v458
    %v591 = vpack.c.b16 %v471, %v459
    %v592 = vpack.c.b16 %v472, %v460
    %v593 = vpack.c.b16 %v473, %v461
    %v594 = vpack.c.b16 %v474, %v462
    %v595 = vpack.c.b16 %v475, %v463
    %v596 = vpack.c.b16 %v476, %v464
    %v597 = vpack.c.b16 %v477, %v465
    %v598 = vpack.c.b16 %v478, %v466
    %v599 = vpack.c.b16 %v479, %v467
    %v600 = vpack.c.b16 %v480, %v468
    %v601 = vpack.c.b16 %v481, %v469
    %v602 = vpack.c.b16 %v494, %v482
    %v603 = vpack.c.b16 %v495, %v483
    %v604 = vpack.c.b16 %v496, %v484
    %v605 = vpack.c.b16 %v497, %v485
    %v606 = vpack.c.b16 %v498, %v486
    %v607 = vpack.c.b16 %v499, %v487
    %v608 = vpack.c.b16 %v500, %v488
    %v609 = vpack.c.b16 %v501, %v489
    %v610 = vpack.c.b16 %v502, %v490
    %v611 = vpack.c.b16 %v503, %v491
    %v612 = vpack.c.b16 %v504, %v492
    %v613 = vpack.c.b16 %v505, %v493
    %v614 = vpack.c.b16 %v518, %v506
    %v615 = vpack.c.b16 %v519, %v507
    %v616 = vpack.c.b16 %v520, %v508
    %v617 = vpack.c.b16 %v521, %v509
    %v618 = vpack.c.b16 %v522, %v510
    %v619 = vpack.c.b16 %v523, %v511
    %v620 = vpack.c.b16 %v524, %v512
    %v621 = vpack.c.b16 %v525, %v513
    %v622 = vpack.c.b16 %v526, %v514
    %v623 = vpack.c.b16 %v527, %v515
    %v624 = vpack.c.b16 %v528, %v516
    %v625 = vpack.c.b16 %v529, %v517
    %722 = vmatprep.subr.bf16.mxu0 %v615
    %723 = vmatpush1.bf16.msra.mxu0 %v614
    %724 = vmatprep.subr.bf16.mxu0 %v603
    %725 = vmatpush1.bf16.msra.mxu0 %v602
    %726 = vmatprep.subr.bf16.mxu0 %v591
    %727 = vmatpush1.bf16.msra.mxu0 %v590
    %728 = vmatprep.subr.bf16.mxu0 %v579
    %729 = vmatpush1.bf16.msra.mxu0 %v578
    %730 = vmatprep.subr.bf16.mxu0 %v567
    %731 = vmatpush1.bf16.msra.mxu0 %v566
    %732 = vmatprep.subr.bf16.mxu0 %v555
    %733 = vmatpush1.bf16.msra.mxu0 %v554
    %734 = vmatprep.subr.bf16.mxu0 %v543
    %735 = vmatpush1.bf16.msra.mxu0 %v542
    %736 = vmatprep.subr.bf16.mxu0 %v531
    %737 = vmatpush1.bf16.msra.mxu0 %v530
    %738 = vmatprep.subr.bf16.mxu0 0
    %739 = vmatpush2.bf16.msra.mxu0 0
    %740 = vmatprep.subr.bf16.mxu0 0
    %741 = vmatpush2.bf16.msra.mxu0 0
    %742 = vmatprep.subr.bf16.mxu0 0
    %743 = vmatpush2.bf16.msra.mxu0 0
    %744 = vmatprep.subr.bf16.mxu0 0
    %745 = vmatpush2.bf16.msra.mxu0 0
    %746 = vmatprep.subr.bf16.mxu0 0
    %747 = vmatpush2.bf16.msra.mxu0 0
    %748 = vmatprep.subr.bf16.mxu0 0
    %749 = vmatpush2.bf16.msra.mxu0 0
    %750 = vmatprep.subr.bf16.mxu0 0
    %751 = vmatpush2.bf16.msra.mxu0 0
    %752 = vmatprep.subr.bf16.mxu0 0
    %753 = vmatpush2.bf16.msra.mxu0 0
    %754 = vmatprep.mubr.bf16.mxu0 0
    %755 = vmatmul.mubr.bf16.gmra.mxu0 %v81
    %v756 = vpop.f32.mrf.mxu0
    %v757 = vadd.f32 %v185, %v756
    %v758 = vpop.f32.mrf.mxu0
    %v759 = vadd.f32 %v189, %v758
    %v760 = vpop.f32.mrf.mxu0
    %v761 = vpop.f32.mrf.mxu0
    %762 = vdwg.mxu0
    %763 = vmatprep.subr.bf16.mxu0 %v617
    %764 = vmatpush1.bf16.msra.mxu0 %v616
    %765 = vmatprep.subr.bf16.mxu0 %v605
    %766 = vmatpush1.bf16.msra.mxu0 %v604
    %767 = vmatprep.subr.bf16.mxu0 %v593
    %768 = vmatpush1.bf16.msra.mxu0 %v592
    %769 = vmatprep.subr.bf16.mxu0 %v581
    %770 = vmatpush1.bf16.msra.mxu0 %v580
    %771 = vmatprep.subr.bf16.mxu0 %v569
    %772 = vmatpush1.bf16.msra.mxu0 %v568
    %773 = vmatprep.subr.bf16.mxu0 %v557
    %774 = vmatpush1.bf16.msra.mxu0 %v556
    %775 = vmatprep.subr.bf16.mxu0 %v545
    %776 = vmatpush1.bf16.msra.mxu0 %v544
    %777 = vmatprep.subr.bf16.mxu0 %v533
    %778 = vmatpush1.bf16.msra.mxu0 %v532
    %779 = vmatprep.subr.bf16.mxu0 0
    %780 = vmatpush2.bf16.msra.mxu0 0
    %781 = vmatprep.subr.bf16.mxu0 0
    %782 = vmatpush2.bf16.msra.mxu0 0
    %783 = vmatprep.subr.bf16.mxu0 0
    %784 = vmatpush2.bf16.msra.mxu0 0
    %785 = vmatprep.subr.bf16.mxu0 0
    %786 = vmatpush2.bf16.msra.mxu0 0
    %787 = vmatprep.subr.bf16.mxu0 0
    %788 = vmatpush2.bf16.msra.mxu0 0
    %789 = vmatprep.subr.bf16.mxu0 0
    %790 = vmatpush2.bf16.msra.mxu0 0
    %791 = vmatprep.subr.bf16.mxu0 0
    %792 = vmatpush2.bf16.msra.mxu0 0
    %793 = vmatprep.subr.bf16.mxu0 0
    %794 = vmatpush2.bf16.msra.mxu0 0
    %795 = vmatprep.mubr.bf16.mxu0 0
    %796 = vmatmul.mubr.bf16.gmra.mxu0 %v81
    %v797 = vpop.f32.mrf.mxu0
    %v798 = vadd.f32 %v193, %v797
    %v799 = vpop.f32.mrf.mxu0
    %v800 = vadd.f32 %v197, %v799
    %v801 = vpop.f32.mrf.mxu0
    %v802 = vpop.f32.mrf.mxu0
    %803 = vdwg.mxu0
    %804 = vmatprep.subr.bf16.mxu0 %v619
    %805 = vmatpush1.bf16.msra.mxu0 %v618
    %806 = vmatprep.subr.bf16.mxu0 %v607
    %807 = vmatpush1.bf16.msra.mxu0 %v606
    %808 = vmatprep.subr.bf16.mxu0 %v595
    %809 = vmatpush1.bf16.msra.mxu0 %v594
    %810 = vmatprep.subr.bf16.mxu0 %v583
    %811 = vmatpush1.bf16.msra.mxu0 %v582
    %812 = vmatprep.subr.bf16.mxu0 %v571
    %813 = vmatpush1.bf16.msra.mxu0 %v570
    %814 = vmatprep.subr.bf16.mxu0 %v559
    %815 = vmatpush1.bf16.msra.mxu0 %v558
    %816 = vmatprep.subr.bf16.mxu0 %v547
    %817 = vmatpush1.bf16.msra.mxu0 %v546
    %818 = vmatprep.subr.bf16.mxu0 %v535
    %819 = vmatpush1.bf16.msra.mxu0 %v534
    %820 = vmatprep.subr.bf16.mxu0 0
    %821 = vmatpush2.bf16.msra.mxu0 0
    %822 = vmatprep.subr.bf16.mxu0 0
    %823 = vmatpush2.bf16.msra.mxu0 0
    %824 = vmatprep.subr.bf16.mxu0 0
    %825 = vmatpush2.bf16.msra.mxu0 0
    %826 = vmatprep.subr.bf16.mxu0 0
    %827 = vmatpush2.bf16.msra.mxu0 0
    %828 = vmatprep.subr.bf16.mxu0 0
    %829 = vmatpush2.bf16.msra.mxu0 0
    %830 = vmatprep.subr.bf16.mxu0 0
    %831 = vmatpush2.bf16.msra.mxu0 0
    %832 = vmatprep.subr.bf16.mxu0 0
    %833 = vmatpush2.bf16.msra.mxu0 0
    %834 = vmatprep.subr.bf16.mxu0 0
    %835 = vmatpush2.bf16.msra.mxu0 0
    %836 = vmatprep.mubr.bf16.mxu0 0
    %837 = vmatmul.mubr.bf16.gmra.mxu0 %v81
    %v838 = vpop.f32.mrf.mxu0
    %v839 = vadd.f32 %v201, %v838
    %v840 = vpop.f32.mrf.mxu0
    %v841 = vadd.f32 %v205, %v840
    %v842 = vpop.f32.mrf.mxu0
    %v843 = vpop.f32.mrf.mxu0
    %844 = vdwg.mxu0
    %845 = vmatprep.subr.bf16.mxu0 %v621
    %846 = vmatpush1.bf16.msra.mxu0 %v620
    %847 = vmatprep.subr.bf16.mxu0 %v609
    %848 = vmatpush1.bf16.msra.mxu0 %v608
    %849 = vmatprep.subr.bf16.mxu0 %v597
    %850 = vmatpush1.bf16.msra.mxu0 %v596
    %851 = vmatprep.subr.bf16.mxu0 %v585
    %852 = vmatpush1.bf16.msra.mxu0 %v584
    %853 = vmatprep.subr.bf16.mxu0 %v573
    %854 = vmatpush1.bf16.msra.mxu0 %v572
    %855 = vmatprep.subr.bf16.mxu0 %v561
    %856 = vmatpush1.bf16.msra.mxu0 %v560
    %857 = vmatprep.subr.bf16.mxu0 %v549
    %858 = vmatpush1.bf16.msra.mxu0 %v548
    %859 = vmatprep.subr.bf16.mxu0 %v537
    %860 = vmatpush1.bf16.msra.mxu0 %v536
    %861 = vmatprep.subr.bf16.mxu0 0
    %862 = vmatpush2.bf16.msra.mxu0 0
    %863 = vmatprep.subr.bf16.mxu0 0
    %864 = vmatpush2.bf16.msra.mxu0 0
    %865 = vmatprep.subr.bf16.mxu0 0
    %866 = vmatpush2.bf16.msra.mxu0 0
    %867 = vmatprep.subr.bf16.mxu0 0
    %868 = vmatpush2.bf16.msra.mxu0 0
    %869 = vmatprep.subr.bf16.mxu0 0
    %870 = vmatpush2.bf16.msra.mxu0 0
    %871 = vmatprep.subr.bf16.mxu0 0
    %872 = vmatpush2.bf16.msra.mxu0 0
    %873 = vmatprep.subr.bf16.mxu0 0
    %874 = vmatpush2.bf16.msra.mxu0 0
    %875 = vmatprep.subr.bf16.mxu0 0
    %876 = vmatpush2.bf16.msra.mxu0 0
    %877 = vmatprep.mubr.bf16.mxu0 0
    %878 = vmatmul.mubr.bf16.gmra.mxu0 %v81
    %v879 = vpop.f32.mrf.mxu0
    %v880 = vadd.f32 %v209, %v879
    %v881 = vpop.f32.mrf.mxu0
    %v882 = vadd.f32 %v213, %v881
    %v883 = vpop.f32.mrf.mxu0
    %v884 = vpop.f32.mrf.mxu0
    %885 = vdwg.mxu0
    %886 = vmatprep.subr.bf16.mxu0 %v623
    %887 = vmatpush1.bf16.msra.mxu0 %v622
    %888 = vmatprep.subr.bf16.mxu0 %v611
    %889 = vmatpush1.bf16.msra.mxu0 %v610
    %890 = vmatprep.subr.bf16.mxu0 %v599
    %891 = vmatpush1.bf16.msra.mxu0 %v598
    %892 = vmatprep.subr.bf16.mxu0 %v587
    %893 = vmatpush1.bf16.msra.mxu0 %v586
    %894 = vmatprep.subr.bf16.mxu0 %v575
    %895 = vmatpush1.bf16.msra.mxu0 %v574
    %896 = vmatprep.subr.bf16.mxu0 %v563
    %897 = vmatpush1.bf16.msra.mxu0 %v562
    %898 = vmatprep.subr.bf16.mxu0 %v551
    %899 = vmatpush1.bf16.msra.mxu0 %v550
    %900 = vmatprep.subr.bf16.mxu0 %v539
    %901 = vmatpush1.bf16.msra.mxu0 %v538
    %902 = vmatprep.subr.bf16.mxu0 0
    %903 = vmatpush2.bf16.msra.mxu0 0
    %904 = vmatprep.subr.bf16.mxu0 0
    %905 = vmatpush2.bf16.msra.mxu0 0
    %906 = vmatprep.subr.bf16.mxu0 0
    %907 = vmatpush2.bf16.msra.mxu0 0
    %908 = vmatprep.subr.bf16.mxu0 0
    %909 = vmatpush2.bf16.msra.mxu0 0
    %910 = vmatprep.subr.bf16.mxu0 0
    %911 = vmatpush2.bf16.msra.mxu0 0
    %912 = vmatprep.subr.bf16.mxu0 0
    %913 = vmatpush2.bf16.msra.mxu0 0
    %914 = vmatprep.subr.bf16.mxu0 0
    %915 = vmatpush2.bf16.msra.mxu0 0
    %916 = vmatprep.subr.bf16.mxu0 0
    %917 = vmatpush2.bf16.msra.mxu0 0
    %918 = vmatprep.mubr.bf16.mxu0 0
    %919 = vmatmul.mubr.bf16.gmra.mxu0 %v81
    %v920 = vpop.f32.mrf.mxu0
    %v921 = vadd.f32 %v217, %v920
    %v922 = vpop.f32.mrf.mxu0
    %v923 = vadd.f32 %v221, %v922
    %v924 = vpop.f32.mrf.mxu0
    %v925 = vpop.f32.mrf.mxu0
    %926 = vdwg.mxu0
    %927 = vmatprep.subr.bf16.mxu0 %v625
    %928 = vmatpush1.bf16.msra.mxu0 %v624
    %929 = vmatprep.subr.bf16.mxu0 %v613
    %930 = vmatpush1.bf16.msra.mxu0 %v612
    %931 = vmatprep.subr.bf16.mxu0 %v601
    %932 = vmatpush1.bf16.msra.mxu0 %v600
    %933 = vmatprep.subr.bf16.mxu0 %v589
    %934 = vmatpush1.bf16.msra.mxu0 %v588
    %935 = vmatprep.subr.bf16.mxu0 %v577
    %936 = vmatpush1.bf16.msra.mxu0 %v576
    %937 = vmatprep.subr.bf16.mxu0 %v565
    %938 = vmatpush1.bf16.msra.mxu0 %v564
    %939 = vmatprep.subr.bf16.mxu0 %v553
    %940 = vmatpush1.bf16.msra.mxu0 %v552
    %941 = vmatprep.subr.bf16.mxu0 %v541
    %942 = vmatpush1.bf16.msra.mxu0 %v540
    %943 = vmatprep.subr.bf16.mxu0 0
    %944 = vmatpush2.bf16.msra.mxu0 0
    %945 = vmatprep.subr.bf16.mxu0 0
    %946 = vmatpush2.bf16.msra.mxu0 0
    %947 = vmatprep.subr.bf16.mxu0 0
    %948 = vmatpush2.bf16.msra.mxu0 0
    %949 = vmatprep.subr.bf16.mxu0 0
    %950 = vmatpush2.bf16.msra.mxu0 0
    %951 = vmatprep.subr.bf16.mxu0 0
    %952 = vmatpush2.bf16.msra.mxu0 0
    %953 = vmatprep.subr.bf16.mxu0 0
    %954 = vmatpush2.bf16.msra.mxu0 0
    %955 = vmatprep.subr.bf16.mxu0 0
    %956 = vmatpush2.bf16.msra.mxu0 0
    %957 = vmatprep.subr.bf16.mxu0 0
    %958 = vmatpush2.bf16.msra.mxu0 0
    %959 = vmatprep.mubr.bf16.mxu0 0
    %960 = vmatmul.mubr.bf16.gmra.mxu0 %v81
    %v961 = vpop.f32.mrf.mxu0
    %v962 = vadd.f32 %v225, %v961
    %v963 = vpop.f32.mrf.mxu0
    %v964 = vadd.f32 %v229, %v963
    %v965 = vpop.f32.mrf.mxu0
    %v966 = vpop.f32.mrf.mxu0
    %967 = vdwg.mxu0
    %v968 = vmax.f32 %v757, 0.0
    %v969 = vmax.f32 %v759, 0.0
    %v970 = vmax.f32 %v798, 0.0
    %v971 = vmax.f32 %v800, 0.0
    %v972 = vmax.f32 %v839, 0.0
    %v973 = vmax.f32 %v841, 0.0
    %v974 = vmax.f32 %v880, 0.0
    %v975 = vmax.f32 %v882, 0.0
    %v976 = vmax.f32 %v921, 0.0
    %v977 = vmax.f32 %v923, 0.0
    %v978 = vmax.f32 %v962, 0.0
    %v979 = vmax.f32 %v964, 0.0
    %v980 = vld [vmem:[#allocation9] sm:$0xff]
    %v981 = vld [vmem:[#allocation9 + $0x8] sm:$0xf]
    %v984 = vlaneseq
    %v985 = vshrl.u32 %v984, 7
    %v986 = vsub.s32 0, %v985
    %v987 = vrot.slane %v980, %v986
    %v988 = vlaneseq
    %v989 = vshrl.u32 %v988, 7
    %v990 = vsub.s32 1, %v989
    %v991 = vrot.slane %v980, %v990
    %v992 = vlaneseq
    %v993 = vshrl.u32 %v992, 7
    %v994 = vsub.s32 2, %v993
    %v995 = vrot.slane %v980, %v994
    %v996 = vlaneseq
    %v997 = vshrl.u32 %v996, 7
    %v998 = vsub.s32 3, %v997
    %v999 = vrot.slane %v980, %v998
    %v1000 = vlaneseq
    %v1001 = vshrl.u32 %v1000, 7
    %v1002 = vsub.s32 4, %v1001
    %v1003 = vrot.slane %v980, %v1002
    %v1004 = vlaneseq
    %v1005 = vshrl.u32 %v1004, 7
    %v1006 = vsub.s32 5, %v1005
    %v1007 = vrot.slane %v980, %v1006
    %v1008 = vlaneseq
    %v1009 = vshrl.u32 %v1008, 7
    %v1010 = vsub.s32 6, %v1009
    %v1011 = vrot.slane %v980, %v1010
    %v1012 = vlaneseq
    %v1013 = vshrl.u32 %v1012, 7
    %v1014 = vsub.s32 7, %v1013
    %v1015 = vrot.slane %v980, %v1014
    %v1016 = vlaneseq
    %v1017 = vshrl.u32 %v1016, 7
    %v1018 = vsub.s32 0, %v1017
    %v1019 = vrot.slane %v981, %v1018
    %v1020 = vlaneseq
    %v1021 = vshrl.u32 %v1020, 7
    %v1022 = vsub.s32 1, %v1021
    %v1023 = vrot.slane %v981, %v1022
    %v1024 = vlaneseq
    %v1025 = vshrl.u32 %v1024, 7
    %v1026 = vsub.s32 2, %v1025
    %v1027 = vrot.slane %v981, %v1026
    %v1028 = vlaneseq
    %v1029 = vshrl.u32 %v1028, 7
    %v1030 = vsub.s32 3, %v1029
    %v1031 = vrot.slane %v981, %v1030
    %v1044 = vmul.f32 %v968, %v987
    %v1045 = vmul.f32 %v969, %v991
    %v1046 = vmul.f32 %v970, %v995
    %v1047 = vmul.f32 %v971, %v999
    %v1048 = vmul.f32 %v972, %v1003
    %v1049 = vmul.f32 %v973, %v1007
    %v1050 = vmul.f32 %v974, %v1011
    %v1051 = vmul.f32 %v975, %v1015
    %v1052 = vmul.f32 %v976, %v1019
    %v1053 = vmul.f32 %v977, %v1023
    %v1054 = vmul.f32 %v978, %v1027
    %v1055 = vmul.f32 %v979, %v1031
    %v1056 = vadd.f32 %v1044, %v1045
    %v1057 = vadd.f32 %v1056, %v1046
    %v1058 = vadd.f32 %v1057, %v1047
    %1059 = vadd.xlane.f32.xlu0 %v1058
    %v1060 = vpop.xlane.xlu0 %1059
    %s1061 = sld [smem:[#allocation2]]
    %v1062 = vstv %s1061
    %v1063 = vadd.f32 %v1060, %v1062
    %vm1064 = vcmask 7168
    %1065 = vst.msk [vmem:[%s5] sm:$0xff] %vm1064, %v1063
    %v1066 = vadd.f32 %v1048, %v1049
    %v1067 = vadd.f32 %v1066, %v1050
    %v1068 = vadd.f32 %v1067, %v1051
    %1069 = vadd.xlane.f32.xlu0 %v1068
    %v1070 = vpop.xlane.xlu0 %1069
    %s1071 = sld [smem:[#allocation2 + $0x1]]
    %v1072 = vstv %s1071
    %v1073 = vadd.f32 %v1070, %v1072
    %vm1074 = vcmask 15368
    %1075 = vst.msk [vmem:[%s5] sm:$0xff] %vm1074, %v1073
    %v1076 = vadd.f32 %v1052, %v1053
    %v1077 = vadd.f32 %v1076, %v1054
    %v1078 = vadd.f32 %v1077, %v1055
    %1079 = vadd.xlane.f32.xlu0 %v1078
    %v1080 = vpop.xlane.xlu0 %1079
    %s1081 = sld [smem:[#allocation2 + $0x2]]
    %v1082 = vstv %s1081
    %v1083 = vadd.f32 %v1080, %v1082
    %vm1084 = vcmask 23568
    %1085 = vst.msk [vmem:[%s5] sm:$0xff] %vm1084, %v1083
    // Predicated region
    $region42: #{tpu_custom_call.1} parent=1 // pred_check
      _
    $region43: #{tpu_custom_call.1} parent=1 // pred_check_branch
      %1087 = sbr.rel (0) target = $region45
    $region44: #{tpu_custom_call.1} parent=1 // pred_region
      _
    $region45: #{tpu_custom_call.1} parent=1 // pred_fallthru
      _
    // Predicated region
    $region46: #{tpu_custom_call.1} parent=1 // pred_check
      _
    $region47: #{tpu_custom_call.1} parent=1 // pred_check_branch
      %1089 = sbr.rel (0) target = $region49
    $region48: #{tpu_custom_call.1} parent=1 // pred_region
      _
    $region49: #{tpu_custom_call.1} parent=1 // pred_fallthru
      _
    %1090 = vsyncpa [#allocation3], 1
    %1091 = vsyncpa [#allocation7], 1
    %1092 = vsyncpa [#allocation10], 1
    %1093 = vsyncpa [#allocation4], 1

</llo_original>
